<compile_context>
chip_gen: v7x
topology: tpu7x:2x2x1
jax: 0.10.0
libtpu: 0.0.40
codegen_flags: <defaults>
</compile_context>

<pallas_src>
import functools

import jax
import jax.numpy as jnp
from jax.experimental import pallas as pl
from jax.experimental.pallas import tpu as pltpu


def _regl1_kernel(row_ref, pred_hbm, mask_ref, tgt_ref, out_ref, gath, sems,
                  *, BK, C):
    # Row gather: pred_hbm is the full [B*HW, C] feature map left in HBM; only
    # the BK rows named by the prefetched indices are copied into VMEM.
    def _copy(j):
        row = row_ref[j]                      # flat row index b*HW + ind[b, k]
        return pltpu.make_async_copy(
            pred_hbm.at[pl.ds(row, 1), :],    # (1, C) contiguous row in HBM
            gath.at[pl.ds(j, 1), :],          # (1, C) slot in VMEM scratch
            sems.at[j])

    @pl.loop(0, BK)
    def _issue(j):                            # start every row DMA (latencies overlap)
        _copy(j).start()

    @pl.loop(0, BK)
    def _collect(j):                          # then wait for all of them
        _copy(j).wait()

    # smooth_l1_loss(pred*mask, target*mask, reduction='sum'), beta = 1.0.
    # tgt_ref already holds target*mask (pre-multiplied in the wrapper).
    x = gath[...] * mask_ref[...]
    d = x - tgt_ref[...]
    ad = jnp.abs(d)
    elem = jnp.where(ad < 1.0, 0.5 * d * d, ad - 0.5)
    out_ref[...] = jnp.sum(elem).reshape(1, 1)


def reg_l1_loss(pred, mask, ind, target):
    """pred: [B,C,H,W] f32, mask: [B,K], ind: [B,K] int, target: [B,K,C] f32."""
    B, C, H, W = pred.shape
    K = ind.shape[1]
    HW = H * W
    BK = B * K

    # Layout glue (outside the kernel): NCHW -> [B*HW, C] so each object's
    # C-vector is a single contiguous row the kernel can DMA-gather.
    pred2d = jnp.transpose(pred, (0, 2, 3, 1)).reshape(B * HW, C).astype(jnp.float32)

    maskf = mask.astype(jnp.float32)                       # (B, K)
    ind_i = ind.astype(jnp.int32)
    # Flat row index into pred2d for every (b, k) object slot (prefetched to SMEM).
    # NOTE: ind is assumed in [0, HW), matching the PyTorch gather contract.
    row_ind = (jnp.arange(B, dtype=jnp.int32)[:, None] * HW + ind_i).reshape(BK)

    mask_bk = jnp.broadcast_to(maskf[:, :, None], (B, K, C)).reshape(BK, C)
    tgt_bk = (target.astype(jnp.float32) * maskf[:, :, None]).reshape(BK, C)

    kernel = functools.partial(_regl1_kernel, BK=BK, C=C)

    sl1_sum = pl.pallas_call(
        kernel,
        out_shape=jax.ShapeDtypeStruct((1, 1), jnp.float32),
        grid_spec=pltpu.PrefetchScalarGridSpec(
            num_scalar_prefetch=1,             # row_ind -> SMEM, drives the DMA gather
            grid=(1,),                         # all batches folded into one grid step
            in_specs=[
                pl.BlockSpec(memory_space=pl.ANY),              # pred2d stays in HBM
                pl.BlockSpec((BK, C), lambda i, row: (0, 0)),   # mask (pre-broadcast)
                pl.BlockSpec((BK, C), lambda i, row: (0, 0)),   # target * mask
            ],
            out_specs=pl.BlockSpec((1, 1), lambda i, row: (0, 0)),
            scratch_shapes=[
                pltpu.VMEM((BK, C), jnp.float32),      # gathered pred rows
                pltpu.SemaphoreType.DMA((BK,)),        # one sem per row DMA
            ],
        ),
        compiler_params=pltpu.CompilerParams(
            dimension_semantics=("arbitrary",)),
    )(row_ind, pred2d, mask_bk, tgt_bk)

    # Denominator (mask expanded over C, then summed) computed once here; the
    # final divide is a single cheap scalar op outside the kernel.
    denom = jnp.sum(maskf) * jnp.float32(C) + jnp.float32(1e-4)
    return sl1_sum[0, 0] / denom


def _reference(pred, mask, ind, target):
    # Pure-JAX reference mirroring the PyTorch module (F.smooth_l1_loss, beta=1).
    B, C, H, W = pred.shape
    feat = jnp.transpose(pred, (0, 2, 3, 1)).reshape(B, H * W, C)
    gathered = jnp.take_along_axis(feat, ind[:, :, None].astype(jnp.int32), axis=1)
    m = mask.astype(jnp.float32)[:, :, None]
    m = jnp.broadcast_to(m, gathered.shape)
    x = gathered * m
    y = target.astype(jnp.float32) * m
    d = x - y
    ad = jnp.abs(d)
    elem = jnp.where(ad < 1.0, 0.5 * d * d, ad - 0.5)
    return jnp.sum(elem) / (jnp.sum(m) + 0.0001)


if __name__ == "__main__":
    B, C, H, W, K = 2, 4, 16, 16, 8
    key = jax.random.PRNGKey(0)
    k1, k2, k3, k4 = jax.random.split(key, 4)

    pred = jax.random.normal(k1, (B, C, H, W), dtype=jnp.float32)
    target = jax.random.normal(k2, (B, K, C), dtype=jnp.float32)
    ind = jax.random.randint(k3, (B, K), 0, H * W, dtype=jnp.int32)
    mask = (jax.random.uniform(k4, (B, K)) > 0.3).astype(jnp.float32)

    loss = reg_l1_loss(pred, mask, ind, target)
    jax.block_until_ready(loss)

    ref = _reference(pred, mask, ind, target)
    assert jnp.allclose(loss, ref, rtol=1e-5, atol=1e-5), (loss, ref)
    print("KERNEL_OK")
</pallas_src>

<mosaic_0001>
module attributes {stable_mosaic.version = 11 : i64} {
  func.func @_regl1_kernel(%arg0: i32, %arg1: memref<16xi32, #tpu.memory_space<smem>>, %arg2: memref<512x4xf32, #tpu.memory_space<any>>, %arg3: memref<16x4xf32, #tpu.memory_space<vmem>>, %arg4: memref<16x4xf32, #tpu.memory_space<vmem>>, %arg5: memref<1x1xf32, #tpu.memory_space<vmem>>, %arg6: memref<16x4xf32, #tpu.memory_space<vmem>>, %arg7: memref<16x!tpu.dma_semaphore, #tpu.memory_space<semaphore_mem>>) attributes {dimension_semantics = [#tpu.dimension_semantics<arbitrary>], iteration_bounds = array<i64: 1>, scalar_prefetch = 1 : i64, scratch_operands = 2 : i64, tpu.core_type = #tpu.core_type<tc>, window_params = [{}, {pipeline_mode = #tpu.pipeline_mode<synchronous>, transform_indices = @transform_1, window_bounds = array<i64: 16, 4>}, {pipeline_mode = #tpu.pipeline_mode<synchronous>, transform_indices = @transform_2, window_bounds = array<i64: 16, 4>}, {pipeline_mode = #tpu.pipeline_mode<synchronous>, transform_indices = @transform_3, window_bounds = array<i64: 1, 1>}]} {
    %c0_i32 = arith.constant 0 : i32
    %c16_i32 = arith.constant 16 : i32
    %0 = arith.addi %c0_i32, %c16_i32 : i32
    %c1_i32 = arith.constant 1 : i32
    scf.for %arg8 = %c0_i32 to %0 step %c1_i32  : i32 {
      %c1_i32_15 = arith.constant 1 : i32
      %22 = arith.muli %arg8, %c1_i32_15 : i32
      %c0_i32_16 = arith.constant 0 : i32
      %23 = arith.addi %c0_i32_16, %22 : i32
      %24 = arith.index_cast %23 : i32 to index
      %25 = memref.load %arg1[%24] : memref<16xi32, #tpu.memory_space<smem>>
      %c0_i32_17 = arith.constant 0 : i32
      %26 = tpu.memref_slice %arg2[%25, %c0_i32_17] : memref<512x4xf32, #tpu.memory_space<any>> -> memref<1x4xf32, #tpu.memory_space<any>>
      %c0_i32_18 = arith.constant 0 : i32
      %27 = tpu.memref_slice %arg6[%23, %c0_i32_18] : memref<16x4xf32, #tpu.memory_space<vmem>> -> memref<1x4xf32, #tpu.memory_space<vmem>>
      %28 = tpu.memref_slice %arg7[%23] : memref<16x!tpu.dma_semaphore, #tpu.memory_space<semaphore_mem>> -> memref<1x!tpu.dma_semaphore, #tpu.memory_space<semaphore_mem>>
      %29 = tpu.memref_squeeze %28 : memref<1x!tpu.dma_semaphore, #tpu.memory_space<semaphore_mem>> -> memref<!tpu.dma_semaphore, #tpu.memory_space<semaphore_mem>>
      tpu.enqueue_dma source(%26 : memref<1x4xf32, #tpu.memory_space<any>>) target(%27 : memref<1x4xf32, #tpu.memory_space<vmem>>) target_semaphore(%29 : memref<!tpu.dma_semaphore, #tpu.memory_space<semaphore_mem>>)
    }
    %c16_i32_0 = arith.constant 16 : i32
    %c0_i32_1 = arith.constant 0 : i32
    %c16_i32_2 = arith.constant 16 : i32
    %1 = arith.addi %c0_i32_1, %c16_i32_2 : i32
    %c1_i32_3 = arith.constant 1 : i32
    scf.for %arg8 = %c0_i32_1 to %1 step %c1_i32_3  : i32 {
      %c1_i32_15 = arith.constant 1 : i32
      %22 = arith.muli %arg8, %c1_i32_15 : i32
      %c0_i32_16 = arith.constant 0 : i32
      %23 = arith.addi %c0_i32_16, %22 : i32
      %24 = arith.index_cast %23 : i32 to index
      %25 = memref.load %arg1[%24] : memref<16xi32, #tpu.memory_space<smem>>
      %c0_i32_17 = arith.constant 0 : i32
      %26 = tpu.memref_slice %arg2[%25, %c0_i32_17] : memref<512x4xf32, #tpu.memory_space<any>> -> memref<1x4xf32, #tpu.memory_space<any>>
      %c0_i32_18 = arith.constant 0 : i32
      %27 = tpu.memref_slice %arg6[%23, %c0_i32_18] : memref<16x4xf32, #tpu.memory_space<vmem>> -> memref<1x4xf32, #tpu.memory_space<vmem>>
      %28 = tpu.memref_slice %arg7[%23] : memref<16x!tpu.dma_semaphore, #tpu.memory_space<semaphore_mem>> -> memref<1x!tpu.dma_semaphore, #tpu.memory_space<semaphore_mem>>
      %29 = tpu.memref_squeeze %28 : memref<1x!tpu.dma_semaphore, #tpu.memory_space<semaphore_mem>> -> memref<!tpu.dma_semaphore, #tpu.memory_space<semaphore_mem>>
      tpu.wait_dma2 semaphore(%29 : memref<!tpu.dma_semaphore, #tpu.memory_space<semaphore_mem>>) src(%26 : memref<1x4xf32, #tpu.memory_space<any>>) dst(%27 : memref<1x4xf32, #tpu.memory_space<vmem>>)
    }
    %c16_i32_4 = arith.constant 16 : i32
    %c0 = arith.constant 0 : index
    %c0_5 = arith.constant 0 : index
    %2 = vector.load %arg6[%c0, %c0_5] : memref<16x4xf32, #tpu.memory_space<vmem>>, vector<16x4xf32>
    %c0_6 = arith.constant 0 : index
    %c0_7 = arith.constant 0 : index
    %3 = vector.load %arg3[%c0_6, %c0_7] : memref<16x4xf32, #tpu.memory_space<vmem>>, vector<16x4xf32>
    %4 = arith.mulf %2, %3 : vector<16x4xf32>
    %c0_8 = arith.constant 0 : index
    %c0_9 = arith.constant 0 : index
    %5 = vector.load %arg4[%c0_8, %c0_9] : memref<16x4xf32, #tpu.memory_space<vmem>>, vector<16x4xf32>
    %6 = arith.subf %4, %5 : vector<16x4xf32>
    %7 = math.absf %6 : vector<16x4xf32>
    %cst = arith.constant 1.000000e+00 : f32
    %8 = vector.broadcast %cst : f32 to vector<16x4xf32>
    %9 = arith.cmpf olt, %7, %8 : vector<16x4xf32>
    %cst_10 = arith.constant 5.000000e-01 : f32
    %10 = vector.broadcast %cst_10 : f32 to vector<16x4xf32>
    %11 = arith.mulf %10, %6 : vector<16x4xf32>
    %12 = arith.mulf %11, %6 : vector<16x4xf32>
    %cst_11 = arith.constant 5.000000e-01 : f32
    %13 = vector.broadcast %cst_11 : f32 to vector<16x4xf32>
    %14 = arith.subf %7, %13 : vector<16x4xf32>
    %15 = arith.select %9, %12, %14 : vector<16x4xi1>, vector<16x4xf32>
    %16 = vector.shape_cast %15 : vector<16x4xf32> to vector<1x16x4xf32>
    %cst_12 = arith.constant dense<0.000000e+00> : vector<1xf32>
    %17 = vector.multi_reduction <add>, %16, %cst_12 [1, 2] : vector<1x16x4xf32> to vector<1xf32>
    %18 = vector.shape_cast %17 : vector<1xf32> to vector<1x1x1xf32>
    %19 = vector.extract %18[0, 0, 0] : f32 from vector<1x1x1xf32>
    %20 = vector.broadcast %19 : f32 to vector<1x1xf32>
    %c0_13 = arith.constant 0 : index
    %c0_14 = arith.constant 0 : index
    %21 = vector.load %arg5[%c0_13, %c0_14] : memref<1x1xf32, #tpu.memory_space<vmem>>, vector<1x1xf32>
    tpu.vector_store %arg5[%c0_13, %c0_14], %20 {strides = array<i32>} : memref<1x1xf32, #tpu.memory_space<vmem>>, vector<1x1xf32>,
    return
  }
  func.func @transform_1(%arg0: i32, %arg1: memref<16xi32, #tpu.memory_space<smem>>) -> (i32, i32) {
    %c0_i32 = arith.constant 0 : i32
    %c0_i32_0 = arith.constant 0 : i32
    %c0_i32_1 = arith.constant 0 : i32
    return %c0_i32, %c0_i32_0 : i32, i32
  }
  func.func @transform_2(%arg0: i32, %arg1: memref<16xi32, #tpu.memory_space<smem>>) -> (i32, i32) {
    %c0_i32 = arith.constant 0 : i32
    %c0_i32_0 = arith.constant 0 : i32
    %c0_i32_1 = arith.constant 0 : i32
    return %c0_i32, %c0_i32_0 : i32, i32
  }
  func.func @transform_3(%arg0: i32, %arg1: memref<16xi32, #tpu.memory_space<smem>>) -> (i32, i32) {
    %c0_i32 = arith.constant 0 : i32
    %c0_i32_0 = arith.constant 0 : i32
    %c0_i32_1 = arith.constant 0 : i32
    return %c0_i32, %c0_i32_0 : i32, i32
  }
}

</mosaic_0001>

<llo_original>
// kernel: tpu_custom_call.1
$region0: #{tpu_custom_call.1}
  #allocation0 [shape = 'u32[]', space=smem, size = 0x4, offset = 0x4, fixed_abs, tag = 'smem constant byte address 0x4 - core index']
  #allocation1 [shape = 'u32[144,128]{1,0:T(1,128)}', space=vmem, size = 0x12000, scoped, tag = 'internal scratch']
  #allocation2 [shape = 'f32[16,4]{1,0:T(8,128)}', space=vmem, size = 0x2000, scoped, tag = 'scratch operand']
  #allocation3 [shape = 's32[16]{0}', space=sflag, size = 0x40, scoped, tag = 'scratch operand']
  #allocation4 [shape = 's32[1]{0}', space=sflag, size = 0x4, scoped, tag = 'scoped memory for tpu_custom_call.1']
  #allocation5 [shape = 'u8[512]{0}', space=smem, size = 0x200, scoped, tag = 'prefetched SMEM operand 0']
  #allocation8 [shape = 's32[]', space=sflag, size = 0x4, offset = 0, fixed_abs, tag = 'sflag constant byte address 0x0 - dummy sync flag']
  %s0 = inlined_call_operand.vmem [shape: s32[16], index: 0, kind: input, shape index: {}]
  %s1 = inlined_call_operand.vmem [shape: f32[512,4], index: 1, kind: input, shape index: {}]
  %s2 = inlined_call_operand.vmem [shape: f32[16,4], index: 2, kind: input, shape index: {}]
  %s3 = inlined_call_operand.vmem [shape: f32[16,4], index: 3, kind: input, shape index: {}]
  %s4 = inlined_call_operand.hbm [shape: f32[1,1], index: 4, kind: output, shape index: {}]
  %s5 = sld [smem:[#allocation0]]
  $region62: #{tpu_custom_call.1} parent=0
    _
  %s7 = ssub.s32 1, %s5
  %s8 = scalar_select 0, %s7, %s5
  %s9 = sshll.u32 %s0, 4
  %s10 = int_to_ptr.vmem [resolvable:$true] %s9
  %12 = dma.vmem_to_smem %s10, 16, [#allocation5], [#allocation4]
  %13 = dma.done [#allocation4], 16
  %14 = sfence
  $region1: #{tpu_custom_call.1} parent=0
    #allocation6 [shape = 'u8[512]{0}', space=vmem, size = 0x400, scoped, tag = 'output window, operand 0, single buffered']
    #allocation7 [shape = 's32[1]{0}', space=sflag, size = 0x4, scoped, tag = 'scoped memory for tpu_custom_call.1']
    %15 = vsyncpa [#allocation7], 0
    // Predicated region
    $region2: #{tpu_custom_call.1} parent=1 // pred_check
      _
    $region3: #{tpu_custom_call.1} parent=1 // pred_check_branch
      %17 = sbr.rel (0) target = $region5
    $region4: #{tpu_custom_call.1} parent=1 // pred_region
      _
    $region5: #{tpu_custom_call.1} parent=1 // pred_fallthru
      _
    // Predicated region
    $region6: #{tpu_custom_call.1} parent=1 // pred_check
      _
    $region7: #{tpu_custom_call.1} parent=1 // pred_check_branch
      %19 = sbr.rel (0) target = $region9
    $region8: #{tpu_custom_call.1} parent=1 // pred_region
      _
    $region9: #{tpu_custom_call.1} parent=1 // pred_fallthru
      _
    loop: start=0, step=1, limit=16
    $region10: #{tpu_custom_call.1} parent=1 // loop_pre_header
      _
    $region11: #{tpu_custom_call.1} parent=1 // loop_header
      %s21 = sphi 0, %s25
      %p22 = scmp.ge.s32.totalorder %s21, 16
    $region12: #{tpu_custom_call.1} parent=1 // loop_header_branch
      %24 = sbr.rel (%p22) target = $region16
    $region13: #{tpu_custom_call.1} parent=1 // loop_body
      %s26 = sld [smem:[#allocation5 + %s21]]
      %s27 = scalar_lea.vmem %s1, %s26
      %s28 = scalar_lea.vmem [#allocation2], %s21
      %s29 = scalar_lea.sflag [#allocation3], %s21
      %p31 = scmp.lt.u32.totalorder 1, 8
      %p32 = pneg %p31
      // Predicated region
      $region17: #{tpu_custom_call.1} parent=13 // pred_check
        _
      $region18: #{tpu_custom_call.1} parent=13 // pred_check_branch
        %34 = sbr.rel (%p31) target = $region20
      $region19: #{tpu_custom_call.1} parent=13 // pred_region
        %s49 = sand.u32 1, 7
        %p50 = scmp.eq.s32.totalorder %s49, 0
        %p51 = pneg %p50
        // Predicated region
        $region32: #{tpu_custom_call.1} parent=19 // pred_check
          _
        $region33: #{tpu_custom_call.1} parent=19 // pred_check_branch
          %53 = sbr.rel (%p50) target = $region35
        $region34: #{tpu_custom_call.1} parent=19 // pred_region
          %s54 = sand.u32 1, 7
          %s55 = ssub.s32 1, %s54
          %s56 = scalar_lea.vmem %s27, %s55
          %s57 = ssub.s32 1, %s54
          %s58 = scalar_lea.vmem %s28, %s57 [#allocation2]
          %s59 = sshllo.u32 0, %s54
          loop: start=0, step=1, limit=1
          $region36: #{tpu_custom_call.1} parent=34 // loop_pre_header
            _
          $region37: #{tpu_custom_call.1} parent=34 // loop_header
            %s61 = sphi 0, %s65
            %p62 = scmp.ge.s32.totalorder %s61, 1
            %s66 = sphi %s56, %s56
            %s67 = sphi %s58, %s58
          $region38: #{tpu_custom_call.1} parent=34 // loop_header_branch
            %64 = sbr.rel (%p62) target = $region42
          $region39: #{tpu_custom_call.1} parent=34 // loop_body
            %v68 = vld [vmem:[%s66] sm:%s59]
            %69 = vst [vmem:[%s67] sm:%s59] %v68
          $region40: #{tpu_custom_call.1} parent=34 // loop_footer
            %s65 = sadd.s32 1, %s61
          $region41: #{tpu_custom_call.1} parent=34 // loop_footer_branch
            %60 = sbr.rel target = $region37
          $region42: #{tpu_custom_call.1} parent=34 // loop_exit
            _
        $region35: #{tpu_custom_call.1} parent=19 // pred_fallthru
          _
      $region20: #{tpu_custom_call.1} parent=13 // pred_fallthru
        _
      // Predicated region
      $region21: #{tpu_custom_call.1} parent=13 // pred_check
        %p35 = pneg %p31
      $region22: #{tpu_custom_call.1} parent=13 // pred_check_branch
        %37 = sbr.rel (%p35) target = $region24
      $region23: #{tpu_custom_call.1} parent=13 // pred_region
        %s38 = sshllo.u32 0, 1
        loop: start=0, step=1, limit=1
        $region25: #{tpu_custom_call.1} parent=23 // loop_pre_header
          _
        $region26: #{tpu_custom_call.1} parent=23 // loop_header
          %s40 = sphi 0, %s44
          %p41 = scmp.ge.s32.totalorder %s40, 1
          %s45 = sphi %s27, %s27
          %s46 = sphi %s28, %s28
        $region27: #{tpu_custom_call.1} parent=23 // loop_header_branch
          %43 = sbr.rel (%p41) target = $region31
        $region28: #{tpu_custom_call.1} parent=23 // loop_body
          %v47 = vld [vmem:[%s45] sm:%s38]
          %48 = vst [vmem:[%s46] sm:%s38] %v47
        $region29: #{tpu_custom_call.1} parent=23 // loop_footer
          %s44 = sadd.s32 1, %s40
        $region30: #{tpu_custom_call.1} parent=23 // loop_footer_branch
          %39 = sbr.rel target = $region26
        $region31: #{tpu_custom_call.1} parent=23 // loop_exit
          _
      $region24: #{tpu_custom_call.1} parent=13 // pred_fallthru
        _
      // Predicated region
      $region43: #{tpu_custom_call.1} parent=13 // pred_check
        _
      $region44: #{tpu_custom_call.1} parent=13 // pred_check_branch
        %72 = sbr.rel (0) target = $region46
      $region45: #{tpu_custom_call.1} parent=13 // pred_region
        %73 = vsyncadd %s29, 16
      $region46: #{tpu_custom_call.1} parent=13 // pred_fallthru
        _
    $region14: #{tpu_custom_call.1} parent=1 // loop_footer
      %s25 = sadd.s32 1, %s21
    $region15: #{tpu_custom_call.1} parent=1 // loop_footer_branch
      %20 = sbr.rel target = $region11
    $region16: #{tpu_custom_call.1} parent=1 // loop_exit
      _
    loop: start=0, step=1, limit=16
    $region47: #{tpu_custom_call.1} parent=1 // loop_pre_header
      _
    $region48: #{tpu_custom_call.1} parent=1 // loop_header
      %s75 = sphi 0, %s79
      %p76 = scmp.ge.s32.totalorder %s75, 16
    $region49: #{tpu_custom_call.1} parent=1 // loop_header_branch
      %78 = sbr.rel (%p76) target = $region53
    $region50: #{tpu_custom_call.1} parent=1 // loop_body
      %s80 = sld [smem:[#allocation5 + %s75]]
      %s81 = scalar_lea.sflag [#allocation3], %s75
      %s82 = smul.u32 1, 1
      %s83 = sshll.u32 %s82, 4
      %84 = dma.done %s81, %s83
    $region51: #{tpu_custom_call.1} parent=1 // loop_footer
      %s79 = sadd.s32 1, %s75
    $region52: #{tpu_custom_call.1} parent=1 // loop_footer_branch
      %74 = sbr.rel target = $region48
    $region53: #{tpu_custom_call.1} parent=1 // loop_exit
      _
    %v85 = vld [vmem:[#allocation2] sm:$0xff]
    %v86 = vld [vmem:[#allocation2 + $0x8] sm:$0xff]
    %v87 = vld [vmem:[%s2] sm:$0xff]
    %v88 = vld [vmem:[%s2 + $0x8] sm:$0xff]
    %v89 = vmul.f32 %v85, %v87
    %v90 = vmul.f32 %v86, %v88
    %v91 = vld [vmem:[%s3] sm:$0xff]
    %v92 = vld [vmem:[%s3 + $0x8] sm:$0xff]
    %v93 = vsub.f32 %v89, %v91
    %v94 = vsub.f32 %v90, %v92
    %v95 = vand.u32 2147483647, %v93
    %v96 = vand.u32 2147483647, %v94
    %vm97 = vcmp.lt.f32.partialorder %v95, 1.0
    %vm98 = vcmp.lt.f32.partialorder %v96, 1.0
    %v99 = vmul.f32 %v93, 0.5
    %v100 = vmul.f32 %v94, 0.5
    %v101 = vmul.f32 %v99, %v93
    %v102 = vmul.f32 %v100, %v94
    %v103 = vsub.f32 %v95, 0.5
    %v104 = vsub.f32 %v96, 0.5
    %v105 = vsel %vm97, %v101, %v103
    %v106 = vsel %vm98, %v102, %v104
    %vm107 = vcmask 31744
    %v108 = vsel %vm107, %v105, 0.0
    %v109 = vsel %vm107, %v106, 0.0
    %v110 = vadd.f32 %v108, %v109
    %111 = vadd.xlane.f32.xlu0 %v110
    %v112 = vpop.xlane.xlu0 %111
    %v113 = vrot.slane %v112, 4
    %v114 = vadd.f32 %v112, %v113
    %v115 = vrot.slane %v114, 2
    %v116 = vadd.f32 %v114, %v115
    %v117 = vrot.slane %v116, 1
    %v118 = vadd.f32 %v116, %v117
    %s119 = vtos %v118
    %v120 = vstv %s119
    %vm121 = vcmask 0
    %122 = vst.msk [vmem:[#allocation6] sm:$0x1] %vm121, %v120
    // Predicated region
    $region54: #{tpu_custom_call.1} parent=1 // pred_check
      _
    $region55: #{tpu_custom_call.1} parent=1 // pred_check_branch
      %124 = sbr.rel (0) target = $region57
    $region56: #{tpu_custom_call.1} parent=1 // pred_region
      %s126 = ssub.s32 16, 16
      %127 = vsyncadd [#allocation7], %s126
      %s129 = sshll.u32 [#allocation6], 4
      %s130 = int_to_ptr.vmem [resolvable:$true] %s129
      %132 = dma.vmem_to_hbm [thread:$0]  %s130, 16, %s4, [#allocation7]
    $region57: #{tpu_custom_call.1} parent=1 // pred_fallthru
      _
    // Predicated region
    $region58: #{tpu_custom_call.1} parent=1 // pred_check
      _
    $region59: #{tpu_custom_call.1} parent=1 // pred_check_branch
      %134 = sbr.rel (0) target = $region61
    $region60: #{tpu_custom_call.1} parent=1 // pred_region
      %135 = dma.done [#allocation7], 16
    $region61: #{tpu_custom_call.1} parent=1 // pred_fallthru
      _
    %136 = vsyncpa [#allocation7], 1
  %137 = vsyncmov [#allocation3]
  %s138 = vpop.sfrf %137
  %p139 = scmp.eq.s32.totalorder %s138, 0
  %p140 = pneg %p139
  %142 = shalt.err (%p140)
  %s143 = scalar_lea.sflag [#allocation3], 1
  %144 = vsyncmov %s143
  %s145 = vpop.sfrf %144
  %p146 = scmp.eq.s32.totalorder %s145, 0
  %p147 = pneg %p146
  %149 = shalt.err (%p147)
  %s150 = scalar_lea.sflag [#allocation3], 2
  %151 = vsyncmov %s150
  %s152 = vpop.sfrf %151
  %p153 = scmp.eq.s32.totalorder %s152, 0
  %p154 = pneg %p153
  %156 = shalt.err (%p154)
  %s157 = scalar_lea.sflag [#allocation3], 3
  %158 = vsyncmov %s157
  %s159 = vpop.sfrf %158
  %p160 = scmp.eq.s32.totalorder %s159, 0
  %p161 = pneg %p160
  %163 = shalt.err (%p161)
  %s164 = scalar_lea.sflag [#allocation3], 4
  %165 = vsyncmov %s164
  %s166 = vpop.sfrf %165
  %p167 = scmp.eq.s32.totalorder %s166, 0
  %p168 = pneg %p167
  %170 = shalt.err (%p168)
  %s171 = scalar_lea.sflag [#allocation3], 5
  %172 = vsyncmov %s171
  %s173 = vpop.sfrf %172
  %p174 = scmp.eq.s32.totalorder %s173, 0
  %p175 = pneg %p174
  %177 = shalt.err (%p175)
  %s178 = scalar_lea.sflag [#allocation3], 6
  %179 = vsyncmov %s178
  %s180 = vpop.sfrf %179
  %p181 = scmp.eq.s32.totalorder %s180, 0
  %p182 = pneg %p181
  %184 = shalt.err (%p182)
  %s185 = scalar_lea.sflag [#allocation3], 7
  %186 = vsyncmov %s185
  %s187 = vpop.sfrf %186
  %p188 = scmp.eq.s32.totalorder %s187, 0
  %p189 = pneg %p188
  %191 = shalt.err (%p189)
  %s192 = scalar_lea.sflag [#allocation3], 8
  %193 = vsyncmov %s192
  %s194 = vpop.sfrf %193
  %p195 = scmp.eq.s32.totalorder %s194, 0
  %p196 = pneg %p195
  %198 = shalt.err (%p196)
  %s199 = scalar_lea.sflag [#allocation3], 9
  %200 = vsyncmov %s199
  %s201 = vpop.sfrf %200
  %p202 = scmp.eq.s32.totalorder %s201, 0
  %p203 = pneg %p202
  %205 = shalt.err (%p203)
  %s206 = scalar_lea.sflag [#allocation3], 10
  %207 = vsyncmov %s206
  %s208 = vpop.sfrf %207
  %p209 = scmp.eq.s32.totalorder %s208, 0
  %p210 = pneg %p209
  %212 = shalt.err (%p210)
  %s213 = scalar_lea.sflag [#allocation3], 11
  %214 = vsyncmov %s213
  %s215 = vpop.sfrf %214
  %p216 = scmp.eq.s32.totalorder %s215, 0
  %p217 = pneg %p216
  %219 = shalt.err (%p217)
  %s220 = scalar_lea.sflag [#allocation3], 12
  %221 = vsyncmov %s220
  %s222 = vpop.sfrf %221
  %p223 = scmp.eq.s32.totalorder %s222, 0
  %p224 = pneg %p223
  %226 = shalt.err (%p224)
  %s227 = scalar_lea.sflag [#allocation3], 13
  %228 = vsyncmov %s227
  %s229 = vpop.sfrf %228
  %p230 = scmp.eq.s32.totalorder %s229, 0
  %p231 = pneg %p230
  %233 = shalt.err (%p231)
  %s234 = scalar_lea.sflag [#allocation3], 14
  %235 = vsyncmov %s234
  %s236 = vpop.sfrf %235
  %p237 = scmp.eq.s32.totalorder %s236, 0
  %p238 = pneg %p237
  %240 = shalt.err (%p238)
  %s241 = scalar_lea.sflag [#allocation3], 15
  %242 = vsyncmov %s241
  %s243 = vpop.sfrf %242
  %p244 = scmp.eq.s32.totalorder %s243, 0
  %p245 = pneg %p244
  %247 = shalt.err (%p245)

</llo_original>
